<compile_context>
chip_gen: v7x
topology: tpu7x:2x2x1
jax: 0.10.0
libtpu: 0.0.40
codegen_flags: <defaults>
</compile_context>

<pallas_src>
import jax
import jax.numpy as jnp
from jax.experimental import pallas as pl
from jax.experimental.pallas import tpu as pltpu

LANE = 128  # TPU lane width; channel axes are zero-padded to a multiple of it.


# ----------------------------------------------------------------------------
# Host-side helpers
# ----------------------------------------------------------------------------

def _round_up(n, m=LANE):
    return ((n + m - 1) // m) * m


def _pad_axis(a, axis, target):
    cur = a.shape[axis]
    assert cur <= target, f"channel count {cur} exceeds padded width {target}"
    if cur == target:
        return a
    pad = [(0, 0)] * a.ndim
    pad[axis] = (0, target - cur)
    return jnp.pad(a, pad)


def _pick_row_tile(h, target=32):
    # Modest row tile: the output block is (2x rows, 2x lanes) of the input
    # block and double-buffered, so keep it friendly to v5e's VMEM as well.
    th = min(h, target)
    while h % th:
        th -= 1
    return th


def _vmem_limit(nbytes):
    # Explicit scoped-VMEM budget: (already double-buffered) block footprint
    # plus headroom, clamped to a cross-chip-safe ceiling (v7x: 64 MiB / TC).
    return int(min(max(nbytes + (8 << 20), 16 << 20), 64 << 20))


# ----------------------------------------------------------------------------
# Kernel 1: fused 1x1 conv (channel matmul) + nearest-neighbour upsample
# ----------------------------------------------------------------------------

def _make_conv1x1_up_kernel(TH, W, Cin, Nout, scale):
    def kernel(x_ref, w_ref, b_ref, o_ref):
        x = x_ref[0].reshape(TH * W, Cin)                          # bf16
        # Weight is pre-duplicated to (Cin, scale*C) on the host, so this one
        # matmul directly emits the lane-interleaved W-repeated output (no
        # in-kernel concatenate; N = scale*128 fills the MXU on v6e/v7x).
        y = jnp.dot(x, w_ref[...], preferred_element_type=jnp.float32)
        y = (y + b_ref[...]).astype(o_ref.dtype).reshape(TH, W, Nout)
        if scale > 1:
            # H repeat of the nearest-neighbour upsample: leading-axis broadcast.
            y = jnp.broadcast_to(y[:, None], (TH, scale, W, Nout))
            y = y.reshape(TH * scale, W, Nout)
        o_ref[0] = y
    return kernel


def conv1x1_upsample(x, w, b, scale):
    """x: (B,H,W,Cin) bf16, w: (Cin, scale*C) bf16 (pre-duplicated),
    b: (1, scale*C) f32.  Returns (B, scale*H, scale*W, C) bf16."""
    B, H, W, Cin = x.shape
    Nout = w.shape[1]
    C = Nout // scale
    TH = _pick_row_tile(H)

    x_blk = TH * W * Cin * 2
    o_blk = TH * scale * W * Nout * 2
    w_b = w.size * 2 + b.size * 4
    flops = 2 * B * H * W * Cin * Nout
    bytes_accessed = (x.size * 2 + w.size * 2 + b.size * 4
                      + B * H * scale * W * Nout * 2)

    out = pl.pallas_call(
        _make_conv1x1_up_kernel(TH, W, Cin, Nout, scale),
        out_shape=jax.ShapeDtypeStruct((B, H * scale, W, Nout), jnp.bfloat16),
        grid=(B, H // TH),
        in_specs=[
            pl.BlockSpec((1, TH, W, Cin), lambda bb, i: (bb, i, 0, 0)),
            pl.BlockSpec((Cin, Nout), lambda bb, i: (0, 0)),
            pl.BlockSpec((1, Nout), lambda bb, i: (0, 0)),
        ],
        out_specs=pl.BlockSpec((1, TH * scale, W, Nout),
                               lambda bb, i: (bb, i, 0, 0)),
        compiler_params=pltpu.CompilerParams(
            dimension_semantics=("parallel", "parallel"),
            vmem_limit_bytes=_vmem_limit(2 * (x_blk + o_blk + w_b))),
        cost_estimate=pl.CostEstimate(
            flops=flops, transcendentals=0, bytes_accessed=bytes_accessed),
    )(x, w, b)
    # (B, sH, W, s*C) -> (B, sH, sW, C) is a pure metadata reshape (the lane
    # packing IS the interleaved W repeat of nearest-neighbour upsampling).
    return out.reshape(B, H * scale, W * scale, C)


# ----------------------------------------------------------------------------
# Kernel 2: fused double 3x3 'same' conv (ResidualConvUnit / out_conv)
# ----------------------------------------------------------------------------

def _make_double_conv_kernel(H, W, Wp, C, C2, relu1, relu2, add_x, n_res):
    def zero_halo(xp):
        # Zero only the halo strips the 3x3 taps read: aligned 8-wide column
        # strips (cover columns 7 and W+8) plus the top/bottom interior rows.
        # Re-done every grid step so correctness never depends on scratch
        # persistence or on which megacore core runs which batch element.
        xp[:, 0:8, :] = jnp.zeros((H + 2, 8, C), jnp.bfloat16)
        xp[:, W + 8:Wp, :] = jnp.zeros((H + 2, Wp - W - 8, C), jnp.bfloat16)
        xp[0:1, 8:8 + W, :] = jnp.zeros((1, W, C), jnp.bfloat16)
        xp[H + 1:H + 2, 8:8 + W, :] = jnp.zeros((1, W, C), jnp.bfloat16)

    def conv3(xp, w_ref, b_ref, relu):
        # Per-tap accumulation: nine K=128 MXU dots chained into one f32 value.
        # No materialised im2col buffer, so tap loads overlap MXU pushes.
        # TODO(synk): derive dx=0/dx=2 taps from the aligned dx=1 window with
        # pltpu.roll to move the sublane shift onto the otherwise-idle XLU.
        acc = None
        t = 0
        for dy in range(3):
            for dx in range(3):
                tap = xp[dy:dy + H, 7 + dx:7 + dx + W, :].reshape(H * W, C)
                p = jnp.dot(tap, w_ref[t * C:(t + 1) * C, :],
                            preferred_element_type=jnp.float32)
                acc = p if acc is None else acc + p
                t += 1
        acc = acc + b_ref[...]
        if relu:
            acc = jnp.maximum(acc, 0.0)
        return acc                                            # (H*W, Cout) f32

    def kernel(x_ref, w1_ref, b1_ref, w2_ref, b2_ref, *rest):
        res_refs = rest[:n_res]
        o_ref = rest[n_res]
        xp1 = rest[n_res + 1]
        xp2 = rest[n_res + 2]
        zero_halo(xp1)
        zero_halo(xp2)
        # Interior stores are (8,128)-aligned along W (column offset 8) and
        # never touch the zeroed halo strips.
        xp1[1:H + 1, 8:8 + W, :] = x_ref[0]
        h = conv3(xp1, w1_ref, b1_ref, relu1)
        # Post-ReLU intermediate stays in VMEM -- no HBM round trip between
        # the two convs of a ResidualConvUnit / out_conv pair.
        xp2[1:H + 1, 8:8 + W, :] = h.astype(jnp.bfloat16).reshape(H, W, C)
        out = conv3(xp2, w2_ref, b2_ref, relu2).reshape(H, W, C2)
        if add_x:
            out = out + x_ref[0].astype(jnp.float32)
        for r in res_refs:                                    # fused skip adds
            out = out + r[0].astype(jnp.float32)
        o_ref[0] = out.astype(o_ref.dtype)
    return kernel


def double_conv3x3(x, p1, p2, *, relu1, relu2, add_x, residuals=()):
    """relu2?(conv2(relu1?(conv1(x)))) [+ x] [+ residuals], in one kernel.

    x: (B,H,W,C) bf16; p*['w']: (9*C, Cout) bf16 (im2col layout); p*['b']: (1, Cout) f32.
    """
    B, H, W, C = x.shape
    C2 = p2['w'].shape[1]
    residuals = tuple(residuals)
    n_res = len(residuals)
    Wp = W + 16  # 8-column aligned halo pad on each side of the scratch tile

    img_spec = pl.BlockSpec((1, H, W, C), lambda bi: (bi, 0, 0, 0))
    in_specs = [
        img_spec,
        pl.BlockSpec((9 * C, C), lambda bi: (0, 0)),
        pl.BlockSpec((1, C), lambda bi: (0, 0)),
        pl.BlockSpec((9 * C, C2), lambda bi: (0, 0)),
        pl.BlockSpec((1, C2), lambda bi: (0, 0)),
    ] + [img_spec for _ in residuals]

    x_blk = H * W * C * 2
    o_blk = H * W * C2 * 2
    wts = (9 * C * C + 9 * C * C2) * 2 + (C + C2) * 4
    scratch = 2 * (H + 2) * Wp * C * 2
    per_step = 2 * (x_blk * (1 + n_res) + o_blk + wts) + scratch

    flops = 2 * B * H * W * 9 * C * (C + C2)
    bytes_accessed = (B * H * W * C * 2 * (1 + n_res) + B * H * W * C2 * 2
                      + (9 * C * C + 9 * C * C2) * 2 + (C + C2) * 4)

    # TODO(synk): at production resolutions add an H-stripe grid axis with a
    # manual halo DMA (memory_space=pl.ANY + pltpu.make_async_copy) so blocks
    # fit v7x's 64 MiB VMEM and both TensorCores stay busy when B == 1.
    return pl.pallas_call(
        _make_double_conv_kernel(H, W, Wp, C, C2, relu1, relu2, add_x, n_res),
        out_shape=jax.ShapeDtypeStruct((B, H, W, C2), jnp.bfloat16),
        grid=(B,),
        in_specs=in_specs,
        out_specs=pl.BlockSpec((1, H, W, C2), lambda bi: (bi, 0, 0, 0)),
        scratch_shapes=[pltpu.VMEM((H + 2, Wp, C), jnp.bfloat16),
                        pltpu.VMEM((H + 2, Wp, C), jnp.bfloat16)],
        compiler_params=pltpu.CompilerParams(
            dimension_semantics=("parallel",),
            vmem_limit_bytes=_vmem_limit(per_step)),
        cost_estimate=pl.CostEstimate(
            flops=flops, transcendentals=0, bytes_accessed=bytes_accessed),
    )(x, p1['w'], p1['b'], p2['w'], p2['b'], *residuals)


# ----------------------------------------------------------------------------
# Module composition
# ----------------------------------------------------------------------------

def residual_conv_unit(x, p, extra_residuals=()):
    # relu(conv2(relu(conv1(x)))) + x [+ skip]: single fused kernel.
    return double_conv3x3(x, p['c1'], p['c2'], relu1=True, relu2=True,
                          add_x=True, residuals=extra_residuals)


def feature_fusion_block(x, skip_x, p):
    if skip_x is not None:
        # skip-connection add fused into the epilogue of rcu1's kernel.
        x = residual_conv_unit(x, p['rcu1'], extra_residuals=(skip_x,))
    return residual_conv_unit(x, p['rcu2'])


def dpt_forward(features, params, scale_factor=(2, 2, 2, 2), hr=False):
    """features: list of 4 NHWC bf16 arrays with lane-padded channels."""
    assert len(features) == 4
    assert not hr  # TODO(synk): hr=True path (extra 4x nearest upsample before out_conv).
    feats = [conv1x1_upsample(f, p['w'], p['b'], s)
             for f, p, s in zip(features, params['conv'], scale_factor)]

    out = feature_fusion_block(feats[3], None, params['ref'][3])
    out = feature_fusion_block(feats[2], out, params['ref'][2])
    out = feature_fusion_block(feats[1], out, params['ref'][1])
    out = feature_fusion_block(feats[0], out, params['ref'][0])

    # out_conv: conv3x3 -> ReLU -> conv3x3 (no final ReLU), fused in one kernel.
    return double_conv3x3(out, params['out1'], params['out2'],
                          relu1=True, relu2=False, add_x=False)


# ----------------------------------------------------------------------------
# Deterministic parameter init (synthetic; mirrors nn.Conv2d shapes, padded)
# ----------------------------------------------------------------------------

def init_params(key, input_dims, hidden_dim, output_dim, kernel_size=3,
                scale_factor=(2, 2, 2, 2)):
    assert kernel_size == 3
    cph = _round_up(hidden_dim)   # lane-padded hidden width
    keys = iter(jax.random.split(key, 128))

    def conv1_p(cin, scale):
        cpi = _round_up(cin)
        kw, kb = next(keys), next(keys)
        s = 1.0 / float(cin ** 0.5)
        w = jax.random.uniform(kw, (cin, hidden_dim), jnp.float32, -s, s)
        b = jax.random.uniform(kb, (1, hidden_dim), jnp.float32, -s, s)
        w = _pad_axis(_pad_axis(w, 0, cpi), 1, cph)
        b = _pad_axis(b, 1, cph)
        # Pre-duplicate along the output axis so the fused 1x1+upsample kernel's
        # single matmul emits the W-repeated (lane-interleaved) output directly.
        w = jnp.concatenate([w] * scale, axis=1).astype(jnp.bfloat16)
        b = jnp.concatenate([b] * scale, axis=1)
        return {'w': w, 'b': b}

    def conv3_p(cout):
        cout_pad = _round_up(cout)
        kw, kb = next(keys), next(keys)
        s = 1.0 / float((hidden_dim * 9) ** 0.5)
        w = jax.random.uniform(kw, (3, 3, hidden_dim, cout), jnp.float32, -s, s)
        b = jax.random.uniform(kb, (1, cout), jnp.float32, -s, s)
        w = _pad_axis(_pad_axis(w, 2, cph), 3, cout_pad)
        w = w.reshape(9 * cph, cout_pad).astype(jnp.bfloat16)   # im2col layout
        return {'w': w, 'b': _pad_axis(b, 1, cout_pad)}

    def rcu_p():
        return {'c1': conv3_p(hidden_dim), 'c2': conv3_p(hidden_dim)}

    params = {
        'conv': [conv1_p(d, s) for d, s in zip(input_dims, scale_factor)],
        'ref': [
            {'rcu1': rcu_p(), 'rcu2': rcu_p()},   # ref_0
            {'rcu1': rcu_p(), 'rcu2': rcu_p()},   # ref_1
            {'rcu1': rcu_p(), 'rcu2': rcu_p()},   # ref_2
            {'rcu2': rcu_p()},                    # ref_3 (with_skip=False)
        ],
        'out1': conv3_p(hidden_dim),
        'out2': conv3_p(output_dim),
    }
    return params


# ----------------------------------------------------------------------------
# Main
# ----------------------------------------------------------------------------

if __name__ == "__main__":
    B, H, W = 2, 8, 8
    input_dims = [8, 8, 16, 16]
    # NOTE: production DPT widths (128/256) fill the 128-lane blocks exactly;
    # the toy width below is zero-padded to 128 lanes (padding is exact zeros
    # end-to-end, so the logical result is unchanged).
    hidden_dim = 32
    output_dim = 16
    scale_factor = (2, 2, 2, 2)

    key = jax.random.PRNGKey(0)
    k_param, *k_feats = jax.random.split(key, 5)

    params = init_params(k_param, input_dims, hidden_dim, output_dim,
                         scale_factor=scale_factor)

    # Build NCHW inputs (matching the PyTorch signature), convert once to the
    # lane-dense NHWC bf16 layout (channels zero-padded to a 128 multiple).
    features_nchw = [
        jax.random.normal(k, (B, c, H, W), jnp.float32)
        for k, c in zip(k_feats, input_dims)
    ]
    features = [
        _pad_axis(jnp.transpose(f, (0, 2, 3, 1)), -1, _round_up(c)).astype(jnp.bfloat16)
        for f, c in zip(features_nchw, input_dims)
    ]

    out = dpt_forward(features, params, scale_factor=scale_factor)
    out = out[..., :output_dim].astype(jnp.float32)   # drop zero-padded channels
    out = jax.block_until_ready(out)

    assert out.shape == (B, 2 * H, 2 * W, output_dim)
    assert bool(jnp.all(jnp.isfinite(out)))
    print("KERNEL_OK")
</pallas_src>

<mosaic_0001>
module attributes {stable_mosaic.version = 11 : i64} {
  func.func @kernel(%arg0: i32, %arg1: i32, %arg2: memref<1x8x8x128xbf16, #tpu.memory_space<vmem>>, %arg3: memref<128x256xbf16, #tpu.memory_space<vmem>>, %arg4: memref<1x256xf32, #tpu.memory_space<vmem>>, %arg5: memref<1x16x8x256xbf16, #tpu.memory_space<vmem>>) attributes {dimension_semantics = [#tpu.dimension_semantics<parallel>, #tpu.dimension_semantics<parallel>], iteration_bounds = array<i64: 2, 1>, scalar_prefetch = 0 : i64, scratch_operands = 0 : i64, tpu.core_type = #tpu.core_type<tc>, window_params = [{transform_indices = @transform_0, window_bounds = array<i64: 1, 8, 8, 128>}, {pipeline_mode = #tpu.pipeline_mode<synchronous>, transform_indices = @transform_1, window_bounds = array<i64: 128, 256>}, {pipeline_mode = #tpu.pipeline_mode<synchronous>, transform_indices = @transform_2, window_bounds = array<i64: 1, 256>}, {transform_indices = @transform_3, window_bounds = array<i64: 1, 16, 8, 256>}]} {
    %c0 = arith.constant 0 : index
    %c0_0 = arith.constant 0 : index
    %c0_1 = arith.constant 0 : index
    %c0_2 = arith.constant 0 : index
    %0 = vector.load %arg2[%c0, %c0_0, %c0_1, %c0_2] : memref<1x8x8x128xbf16, #tpu.memory_space<vmem>>, vector<1x8x8x128xbf16>
    %1 = vector.shape_cast %0 : vector<1x8x8x128xbf16> to vector<8x8x128xbf16>
    %2 = vector.shape_cast %1 : vector<8x8x128xbf16> to vector<64x128xbf16>
    %c0_3 = arith.constant 0 : index
    %c0_4 = arith.constant 0 : index
    %3 = vector.load %arg3[%c0_3, %c0_4] : memref<128x256xbf16, #tpu.memory_space<vmem>>, vector<128x256xbf16>
    %cst = arith.constant dense<0.000000e+00> : vector<64x256xf32>
    %4 = tpu.matmul %2, %3, %cst {dimension_numbers = #tpu.dot_dimension_numbers<[1], [0], [0], [1], [0, 0, 1, 1], [], []>} : vector<64x128xbf16>, vector<128x256xbf16>, vector<64x256xf32> -> vector<64x256xf32>
    %c0_5 = arith.constant 0 : index
    %c0_6 = arith.constant 0 : index
    %5 = vector.load %arg4[%c0_5, %c0_6] : memref<1x256xf32, #tpu.memory_space<vmem>>, vector<1x256xf32>
    %6 = vector.broadcast %5 : vector<1x256xf32> to vector<64x256xf32>
    %7 = arith.addf %4, %6 : vector<64x256xf32>
    %8 = arith.truncf %7 : vector<64x256xf32> to vector<64x256xbf16>
    %9 = vector.shape_cast %8 : vector<64x256xbf16> to vector<8x8x256xbf16>
    %10 = vector.shape_cast %9 : vector<8x8x256xbf16> to vector<8x1x8x256xbf16>
    %11 = vector.shape_cast %10 : vector<8x1x8x256xbf16> to vector<8x1x8x256xbf16>
    %12 = vector.broadcast %11 : vector<8x1x8x256xbf16> to vector<8x2x8x256xbf16>
    %13 = vector.shape_cast %12 : vector<8x2x8x256xbf16> to vector<16x8x256xbf16>
    %c0_7 = arith.constant 0 : index
    %c0_8 = arith.constant 0 : index
    %c0_9 = arith.constant 0 : index
    %c0_10 = arith.constant 0 : index
    %14 = vector.load %arg5[%c0_7, %c0_8, %c0_9, %c0_10] : memref<1x16x8x256xbf16, #tpu.memory_space<vmem>>, vector<1x16x8x256xbf16>
    %15 = vector.shape_cast %14 : vector<1x16x8x256xbf16> to vector<16x8x256xbf16>
    %16 = vector.shape_cast %13 : vector<16x8x256xbf16> to vector<1x16x8x256xbf16>
    tpu.vector_store %arg5[%c0_7, %c0_8, %c0_9, %c0_10], %16 {strides = array<i32>} : memref<1x16x8x256xbf16, #tpu.memory_space<vmem>>, vector<1x16x8x256xbf16>,
    return
  }
  func.func @transform_0(%arg0: i32, %arg1: i32) -> (i32, i32, i32, i32) {
    %c0_i32 = arith.constant 0 : i32
    %c0_i32_0 = arith.constant 0 : i32
    %c0_i32_1 = arith.constant 0 : i32
    return %arg0, %arg1, %c0_i32, %c0_i32_0 : i32, i32, i32, i32
  }
  func.func @transform_1(%arg0: i32, %arg1: i32) -> (i32, i32) {
    %c0_i32 = arith.constant 0 : i32
    %c0_i32_0 = arith.constant 0 : i32
    %c0_i32_1 = arith.constant 0 : i32
    return %c0_i32, %c0_i32_0 : i32, i32
  }
  func.func @transform_2(%arg0: i32, %arg1: i32) -> (i32, i32) {
    %c0_i32 = arith.constant 0 : i32
    %c0_i32_0 = arith.constant 0 : i32
    %c0_i32_1 = arith.constant 0 : i32
    return %c0_i32, %c0_i32_0 : i32, i32
  }
  func.func @transform_3(%arg0: i32, %arg1: i32) -> (i32, i32, i32, i32) {
    %c0_i32 = arith.constant 0 : i32
    %c0_i32_0 = arith.constant 0 : i32
    %c0_i32_1 = arith.constant 0 : i32
    return %arg0, %arg1, %c0_i32, %c0_i32_0 : i32, i32, i32, i32
  }
}

</mosaic_0001>

<llo_original>
// kernel: tpu_custom_call.1
$region0: #{tpu_custom_call.1}
  #allocation0 [shape = 'u32[]', space=smem, size = 0x4, offset = 0x4, fixed_abs, tag = 'smem constant byte address 0x4 - core index']
  #allocation1 [shape = 'u32[144,128]{1,0:T(1,128)}', space=vmem, size = 0x12000, scoped, tag = 'internal scratch']
  %s0 = inlined_call_operand.hbm [shape: bf16[2,8,8,128], index: 0, kind: input, shape index: {}]
  %s1 = inlined_call_operand.hbm [shape: bf16[128,256], index: 1, kind: input, shape index: {}]
  %s2 = inlined_call_operand.vmem [shape: f32[1,256], index: 2, kind: input, shape index: {}]
  %s3 = inlined_call_operand.hbm [shape: bf16[2,16,8,256], index: 3, kind: output, shape index: {}]
  %s4 = sld [smem:[#allocation0]]
  $region53: #{tpu_custom_call.1} parent=0
    _
  %s6 = ssub.s32 1, %s4
  %s7 = scalar_select 0, %s6, %s4
  $region1: #{tpu_custom_call.1} parent=0
    #allocation2 [shape = 'u8[32768]{0}', space=vmem, size = 0x8000, scoped, tag = 'input window, operand 0']
    #allocation3 [shape = 's32[2]{0}', space=sflag, size = 0x8, scoped, tag = 'scoped memory for tpu_custom_call.1']
    #allocation4 [shape = 's32[2]{0}', space=sflag, size = 0x8, scoped, tag = 'scoped memory for tpu_custom_call.1']
    #allocation5 [shape = 'u8[65536]{0}', space=vmem, size = 0x10000, scoped, tag = 'input window, operand 1, single buffered']
    #allocation6 [shape = 's32[1]{0}', space=sflag, size = 0x4, scoped, tag = 'scoped memory for tpu_custom_call.1']
    #allocation7 [shape = 'u8[131072]{0}', space=vmem, size = 0x20000, scoped, tag = 'output window, operand 0']
    %8 = vsyncpa [#allocation3], 0
    %s9 = scalar_lea.sflag [#allocation3], 1
    %10 = vsyncpa %s9, 0
    %11 = vsyncpa [#allocation6], 0
    %12 = vsyncpa [#allocation4], 0
    %s13 = scalar_lea.sflag [#allocation4], 1
    %14 = vsyncpa %s13, 0
    loop: start=0, step=1, limit=4
    $region2: #{tpu_custom_call.1} parent=1 // loop_pre_header
      _
    $region3: #{tpu_custom_call.1} parent=1 // loop_header
      %s16 = sphi 0, %s20
      %p17 = scmp.ge.s32.totalorder %s16, 4
      %s23 = sphi 0, %s35
      %s24 = sphi 0, %s31
      %s25 = sphi 0, %s23
      %s26 = sphi 0, %s24
      %s27 = sphi 0, %s25
      %s28 = sphi 0, %s26
      %s40 = sphi 0, %s42
      %s43 = sphi 0, %s40
      %s44 = sphi 0, %s43
      %s60 = sphi 0, %s44
      %s64 = sphi 0, %s64
      %s66 = sphi 0, %s64
      %s67 = sphi 0, %s66
      %s81 = sphi 0, %s67
      %s85 = sphi 0, %s85
      %s87 = sphi 0, %s85
      %s88 = sphi 0, %s87
      %s102 = sphi 0, %s88
      %s110 = sphi 0, %s112
      %s113 = sphi 0, %s110
      %s114 = sphi 0, %s113
      %s130 = sphi 0, %s114
    $region4: #{tpu_custom_call.1} parent=1 // loop_header_branch
      %19 = sbr.rel (%p17) target = $region8
    $region5: #{tpu_custom_call.1} parent=1 // loop_body
      %s21 = ssub.s32 %s16, 1
      %s22 = ssub.s32 %s16, 2
      %s29 = sadd.s32 1, %s24
      %p30 = scmp.ge.s32.totalorder %s29, 1
      %s31 = scalar_select %p30, 0, %s29
      %s32 = sadd.s32 1, %s23
      %s33 = scalar_select %p30, %s32, %s23
      %p34 = scmp.ge.s32.totalorder %s33, 2
      %s35 = scalar_select %p34, 0, %s33
      %s36 = ssub.s32 %s23, %s35
      %s37 = ssub.s32 %s24, %s31
      %s38 = sor.u32 %s36, %s37
      %p39 = scmp.eq.s32.totalorder %s38, 0
      %s41 = sadd.s32 %s40, 1
      %s42 = scalar_select %p39, %s40, %s41
      %p45 = pneg %p39
      %p46 = scmp.eq.s32.totalorder %s16, 1
      %p47 = por %p45, %p46
      %p48 = scmp.ne.s32.totalorder %s40, %s43
      %p49 = scmp.eq.s32.totalorder %s16, 0
      %p50 = por %p48, %p49
      %p51 = scmp.ne.s32.totalorder %s40, %s43
      %p52 = scmp.eq.s32.totalorder %s21, 1
      %p53 = por %p51, %p52
      %p54 = scmp.ne.s32.totalorder %s43, %s44
      %p55 = scmp.eq.s32.totalorder %s21, 0
      %p56 = por %p54, %p55
      %p57 = scmp.ne.s32.totalorder %s43, %s44
      %p58 = scmp.eq.s32.totalorder %s22, 1
      %p59 = por %p57, %p58
      %p61 = scmp.ne.s32.totalorder %s44, %s60
      %p62 = scmp.eq.s32.totalorder %s22, 0
      %p63 = por %p61, %p62
      %s65 = sadd.s32 %s64, 1
      %p68 = scmp.eq.s32.totalorder %s16, 1
      %p69 = scmp.ne.s32.totalorder %s64, %s66
      %p70 = scmp.eq.s32.totalorder %s16, 0
      %p71 = por %p69, %p70
      %p72 = scmp.ne.s32.totalorder %s64, %s66
      %p73 = scmp.eq.s32.totalorder %s21, 1
      %p74 = por %p72, %p73
      %p75 = scmp.ne.s32.totalorder %s66, %s67
      %p76 = scmp.eq.s32.totalorder %s21, 0
      %p77 = por %p75, %p76
      %p78 = scmp.ne.s32.totalorder %s66, %s67
      %p79 = scmp.eq.s32.totalorder %s22, 1
      %p80 = por %p78, %p79
      %p82 = scmp.ne.s32.totalorder %s67, %s81
      %p83 = scmp.eq.s32.totalorder %s22, 0
      %p84 = por %p82, %p83
      %s86 = sadd.s32 %s85, 1
      %p89 = scmp.eq.s32.totalorder %s16, 1
      %p90 = scmp.ne.s32.totalorder %s85, %s87
      %p91 = scmp.eq.s32.totalorder %s16, 0
      %p92 = por %p90, %p91
      %p93 = scmp.ne.s32.totalorder %s85, %s87
      %p94 = scmp.eq.s32.totalorder %s21, 1
      %p95 = por %p93, %p94
      %p96 = scmp.ne.s32.totalorder %s87, %s88
      %p97 = scmp.eq.s32.totalorder %s21, 0
      %p98 = por %p96, %p97
      %p99 = scmp.ne.s32.totalorder %s87, %s88
      %p100 = scmp.eq.s32.totalorder %s22, 1
      %p101 = por %p99, %p100
      %p103 = scmp.ne.s32.totalorder %s88, %s102
      %p104 = scmp.eq.s32.totalorder %s22, 0
      %p105 = por %p103, %p104
      %s106 = ssub.s32 %s23, %s35
      %s107 = ssub.s32 %s24, %s31
      %s108 = sor.u32 %s106, %s107
      %p109 = scmp.eq.s32.totalorder %s108, 0
      %s111 = sadd.s32 %s110, 1
      %s112 = scalar_select %p109, %s110, %s111
      %p115 = pneg %p109
      %p116 = scmp.eq.s32.totalorder %s16, 1
      %p117 = por %p115, %p116
      %p118 = scmp.ne.s32.totalorder %s110, %s113
      %p119 = scmp.eq.s32.totalorder %s16, 0
      %p120 = por %p118, %p119
      %p121 = scmp.ne.s32.totalorder %s110, %s113
      %p122 = scmp.eq.s32.totalorder %s21, 1
      %p123 = por %p121, %p122
      %p124 = scmp.ne.s32.totalorder %s113, %s114
      %p125 = scmp.eq.s32.totalorder %s21, 0
      %p126 = por %p124, %p125
      %p127 = scmp.ne.s32.totalorder %s113, %s114
      %p128 = scmp.eq.s32.totalorder %s22, 1
      %p129 = por %p127, %p128
      %p131 = scmp.ne.s32.totalorder %s114, %s130
      %p132 = scmp.eq.s32.totalorder %s22, 0
      %p133 = por %p131, %p132
      %p134 = scmp.le.s32.totalorder 1, %s16
      %p135 = scmp.lt.s32.totalorder %s16, 3
      %p136 = pnand %p134, %p135
      %p137 = pneg %p136
      // Predicated region
      $region9: #{tpu_custom_call.1} parent=5 // pred_check
        _
      $region10: #{tpu_custom_call.1} parent=5 // pred_check_branch
        %139 = sbr.rel (%p136) target = $region12
      $region11: #{tpu_custom_call.1} parent=5 // pred_region
        %s140 = ssub.s32 %s16, 1
        // Predicated region
        $region13: #{tpu_custom_call.1} parent=11 // pred_check
          %p141 = pneg %p77
        $region14: #{tpu_custom_call.1} parent=11 // pred_check_branch
          %143 = sbr.rel (%p141) target = $region16
        $region15: #{tpu_custom_call.1} parent=11 // pred_region
          %s145 = ssub.s32 2048, 2048
          %146 = vsyncadd [#allocation6], %s145
          %s147 = sshll.u32 [#allocation5], 4
          %s148 = int_to_ptr.vmem [resolvable:$true] %s147
          %153 = dma.hbm_to_vmem [thread:$0]  %s1, 2048, %s148, [#allocation6], 128, 128, 8
        $region16: #{tpu_custom_call.1} parent=11 // pred_fallthru
          _
        // Predicated region
        $region17: #{tpu_custom_call.1} parent=11 // pred_check
          %p154 = pneg %p98
        $region18: #{tpu_custom_call.1} parent=11 // pred_check_branch
          %156 = sbr.rel (%p154) target = $region20
        $region19: #{tpu_custom_call.1} parent=11 // pred_region
          _
        $region20: #{tpu_custom_call.1} parent=11 // pred_fallthru
          _
      $region12: #{tpu_custom_call.1} parent=5 // pred_fallthru
        _
      %p157 = scmp.lt.s32.totalorder %s16, 2
      // Predicated region
      $region21: #{tpu_custom_call.1} parent=5 // pred_check
        %p158 = pneg %p157
      $region22: #{tpu_custom_call.1} parent=5 // pred_check_branch
        %160 = sbr.rel (%p158) target = $region24
      $region23: #{tpu_custom_call.1} parent=5 // pred_region
        // Predicated region
        $region25: #{tpu_custom_call.1} parent=23 // pred_check
          %p161 = pneg %p50
        $region26: #{tpu_custom_call.1} parent=23 // pred_check_branch
          %163 = sbr.rel (%p161) target = $region28
        $region27: #{tpu_custom_call.1} parent=23 // pred_region
          %s164 = sand.u32 %s40, 1
          %s165 = scalar_lea.sflag [#allocation3], %s164
          %s166 = sand.u32 %s40, 1
          %s167 = smul.addr %s166, 32
          %s168 = scalar_lea.vmem [#allocation2], %s167
          %s169 = smul.u32 8, %s24
          %s171 = ssub.s32 512, 512
          %172 = vsyncadd %s165, %s171
          %s173 = smul.addr %s23, 8
          %s174 = sadd.s32 %s169, %s173
          %s175 = smul.addr %s174, 64
          %s176 = scalar_lea.hbm %s0, %s175
          %s177 = sshll.u32 %s168, 4
          %s178 = int_to_ptr.vmem [resolvable:$true] %s177
          %183 = dma.hbm_to_vmem [thread:$0]  %s176, 512, %s178, %s165, 64, 64, 4
        $region28: #{tpu_custom_call.1} parent=23 // pred_fallthru
          _
      $region24: #{tpu_custom_call.1} parent=5 // pred_fallthru
        _
      %p184 = scmp.le.s32.totalorder 1, %s16
      %p185 = scmp.lt.s32.totalorder %s16, 3
      %p186 = pnand %p184, %p185
      %p187 = pneg %p186
      // Predicated region
      $region29: #{tpu_custom_call.1} parent=5 // pred_check
        _
      $region30: #{tpu_custom_call.1} parent=5 // pred_check_branch
        %189 = sbr.rel (%p186) target = $region32
      $region31: #{tpu_custom_call.1} parent=5 // pred_region
        %s190 = ssub.s32 %s16, 1
        %s191 = sand.u32 %s43, 1
        %s192 = scalar_lea.sflag [#allocation3], %s191
        %s193 = sand.u32 %s43, 1
        %s194 = smul.addr %s193, 32
        %s195 = scalar_lea.vmem [#allocation2], %s194
        // Predicated region
        $region33: #{tpu_custom_call.1} parent=31 // pred_check
          %p196 = pneg %p56
        $region34: #{tpu_custom_call.1} parent=31 // pred_check_branch
          %198 = sbr.rel (%p196) target = $region36
        $region35: #{tpu_custom_call.1} parent=31 // pred_region
          %199 = dma.done %s192, 512
        $region36: #{tpu_custom_call.1} parent=31 // pred_fallthru
          _
        // Predicated region
        $region37: #{tpu_custom_call.1} parent=31 // pred_check
          %p200 = pneg %p77
        $region38: #{tpu_custom_call.1} parent=31 // pred_check_branch
          %202 = sbr.rel (%p200) target = $region40
        $region39: #{tpu_custom_call.1} parent=31 // pred_region
          %203 = dma.done [#allocation6], 2048
        $region40: #{tpu_custom_call.1} parent=31 // pred_fallthru
          _
        %s204 = sand.u32 %s43, 1
        %s205 = scalar_lea.sflag [#allocation3], %s204
        %s206 = sand.u32 %s43, 1
        %s207 = smul.addr %s206, 32
        %s208 = scalar_lea.vmem [#allocation2], %s207
        %p209 = pneg %p56
        %p210 = pneg %p53
        %p211 = pneg %p77
        %p212 = pneg %p74
        %p213 = pneg %p98
        %p214 = pneg %p95
        %p215 = pneg %p126
        %p216 = pneg %p123
        %s217 = sand.u32 %s113, 1
        %s218 = scalar_lea.sflag [#allocation4], %s217
        %s219 = sand.u32 %s113, 1
        %s220 = smul.addr %s219, 128
        %s221 = scalar_lea.vmem [#allocation7], %s220
        %s222 = smul.u32 8, %s26
        %s223 = smul.u32 16, %s26
        %v225 = vld [vmem:[%s195] sm:$0xf]
        %v226 = vld [vmem:[%s195 + $0x4] sm:$0xf]
        %v227 = vld [vmem:[%s195 + $0x8] sm:$0xf]
        %v228 = vld [vmem:[%s195 + $0xc] sm:$0xf]
        %v229 = vld [vmem:[%s195 + $0x10] sm:$0xf]
        %v230 = vld [vmem:[%s195 + $0x14] sm:$0xf]
        %v231 = vld [vmem:[%s195 + $0x18] sm:$0xf]
        %v232 = vld [vmem:[%s195 + $0x1c] sm:$0xf]
        %v233 = vld [vmem:[#allocation5] sm:$0xff]
        %v234 = vld [vmem:[#allocation5 + $0x8] sm:$0xff]
        %v235 = vld [vmem:[#allocation5 + $0x10] sm:$0xff]
        %v236 = vld [vmem:[#allocation5 + $0x18] sm:$0xff]
        %v237 = vld [vmem:[#allocation5 + $0x20] sm:$0xff]
        %v238 = vld [vmem:[#allocation5 + $0x28] sm:$0xff]
        %v239 = vld [vmem:[#allocation5 + $0x30] sm:$0xff]
        %v240 = vld [vmem:[#allocation5 + $0x38] sm:$0xff]
        %v241 = vld [vmem:[#allocation5 + $0x40] sm:$0xff]
        %v242 = vld [vmem:[#allocation5 + $0x48] sm:$0xff]
        %v243 = vld [vmem:[#allocation5 + $0x50] sm:$0xff]
        %v244 = vld [vmem:[#allocation5 + $0x58] sm:$0xff]
        %v245 = vld [vmem:[#allocation5 + $0x60] sm:$0xff]
        %v246 = vld [vmem:[#allocation5 + $0x68] sm:$0xff]
        %v247 = vld [vmem:[#allocation5 + $0x70] sm:$0xff]
        %v248 = vld [vmem:[#allocation5 + $0x78] sm:$0xff]
        %v249 = vld [vmem:[%s2] sm:$0x3]
        %v251 = vlaneseq
        %v252 = vshrl.u32 %v251, 7
        %v253 = vsub.s32 0, %v252
        %v254 = vrot.slane %v249, %v253
        %v255 = vlaneseq
        %v256 = vshrl.u32 %v255, 7
        %v257 = vsub.s32 1, %v256
        %v258 = vrot.slane %v249, %v257
        %v269 = vunpack.c.l.b16 %v225
        %v270 = vunpack.c.l.b16 %v226
        %v271 = vunpack.c.l.b16 %v227
        %v272 = vunpack.c.l.b16 %v228
        %v273 = vunpack.c.l.b16 %v229
        %v274 = vunpack.c.l.b16 %v230
        %v275 = vunpack.c.l.b16 %v231
        %v276 = vunpack.c.l.b16 %v232
        %v277 = vpack.c.b16 %v270, %v269
        %v278 = vpack.c.b16 %v272, %v271
        %v279 = vpack.c.b16 %v274, %v273
        %v280 = vpack.c.b16 %v276, %v275
        %v301 = vunpack.c.l.b16 %v233
        %v302 = vunpack.c.h.b16 %v233
        %v303 = vunpack.c.l.b16 %v234
        %v304 = vunpack.c.h.b16 %v234
        %v305 = vunpack.c.l.b16 %v235
        %v306 = vunpack.c.h.b16 %v235
        %v307 = vunpack.c.l.b16 %v236
        %v308 = vunpack.c.h.b16 %v236
        %v309 = vunpack.c.l.b16 %v237
        %v310 = vunpack.c.h.b16 %v237
        %v311 = vunpack.c.l.b16 %v238
        %v312 = vunpack.c.h.b16 %v238
        %v313 = vunpack.c.l.b16 %v239
        %v314 = vunpack.c.h.b16 %v239
        %v315 = vunpack.c.l.b16 %v240
        %v316 = vunpack.c.h.b16 %v240
        %v317 = vunpack.c.l.b16 %v241
        %v318 = vunpack.c.h.b16 %v241
        %v319 = vunpack.c.l.b16 %v242
        %v320 = vunpack.c.h.b16 %v242
        %v321 = vunpack.c.l.b16 %v243
        %v322 = vunpack.c.h.b16 %v243
        %v323 = vunpack.c.l.b16 %v244
        %v324 = vunpack.c.h.b16 %v244
        %v325 = vunpack.c.l.b16 %v245
        %v326 = vunpack.c.h.b16 %v245
        %v327 = vunpack.c.l.b16 %v246
        %v328 = vunpack.c.h.b16 %v246
        %v329 = vunpack.c.l.b16 %v247
        %v330 = vunpack.c.h.b16 %v247
        %v331 = vunpack.c.l.b16 %v248
        %v332 = vunpack.c.h.b16 %v248
        %v333 = vpack.c.b16 %v303, %v301
        %v334 = vpack.c.b16 %v304, %v302
        %v335 = vpack.c.b16 %v307, %v305
        %v336 = vpack.c.b16 %v308, %v306
        %v337 = vpack.c.b16 %v311, %v309
        %v338 = vpack.c.b16 %v312, %v310
        %v339 = vpack.c.b16 %v315, %v313
        %v340 = vpack.c.b16 %v316, %v314
        %v341 = vpack.c.b16 %v319, %v317
        %v342 = vpack.c.b16 %v320, %v318
        %v343 = vpack.c.b16 %v323, %v321
        %v344 = vpack.c.b16 %v324, %v322
        %v345 = vpack.c.b16 %v327, %v325
        %v346 = vpack.c.b16 %v328, %v326
        %v347 = vpack.c.b16 %v331, %v329
        %v348 = vpack.c.b16 %v332, %v330
        %365 = vmatprep.subr.bf16.mxu0 %v334
        %366 = vmatpush1.bf16.msra.mxu0 %v333
        %367 = vmatprep.subr.bf16.mxu0 %v336
        %368 = vmatpush1.bf16.msra.mxu0 %v335
        %369 = vmatprep.subr.bf16.mxu0 %v338
        %370 = vmatpush1.bf16.msra.mxu0 %v337
        %371 = vmatprep.subr.bf16.mxu0 %v340
        %372 = vmatpush1.bf16.msra.mxu0 %v339
        %373 = vmatprep.subr.bf16.mxu0 %v342
        %374 = vmatpush1.bf16.msra.mxu0 %v341
        %375 = vmatprep.subr.bf16.mxu0 %v344
        %376 = vmatpush1.bf16.msra.mxu0 %v343
        %377 = vmatprep.subr.bf16.mxu0 %v346
        %378 = vmatpush1.bf16.msra.mxu0 %v345
        %379 = vmatprep.subr.bf16.mxu0 %v348
        %380 = vmatpush1.bf16.msra.mxu0 %v347
        %381 = vmatprep.subr.bf16.mxu0 0
        %382 = vmatpush1.bf16.msra.mxu0 0
        %383 = vmatprep.subr.bf16.mxu0 0
        %384 = vmatpush1.bf16.msra.mxu0 0
        %385 = vmatprep.subr.bf16.mxu0 0
        %386 = vmatpush1.bf16.msra.mxu0 0
        %387 = vmatprep.subr.bf16.mxu0 0
        %388 = vmatpush1.bf16.msra.mxu0 0
        %389 = vmatprep.subr.bf16.mxu0 0
        %390 = vmatpush1.bf16.msra.mxu0 0
        %391 = vmatprep.subr.bf16.mxu0 0
        %392 = vmatpush1.bf16.msra.mxu0 0
        %393 = vmatprep.subr.bf16.mxu0 0
        %394 = vmatpush1.bf16.msra.mxu0 0
        %395 = vmatprep.subr.bf16.mxu0 0
        %396 = vmatpush1.bf16.msra.mxu0 0
        %397 = vmatprep.mubr.bf16.mxu0 0
        %398 = vmatmul.mubr.bf16.gmra.mrb[0].mxu0 %v277
        %v399 = vpop.f32.mrb[0].mxu0
        %v400 = vadd.f32 %v254, %v399
        %v401 = vpop.f32.mrb[0].mxu0
        %v402 = vadd.f32 %v258, %v401
        %v403 = vpop.f32.mrb[0].mxu0
        %v404 = vadd.f32 %v254, %v403
        %v405 = vpop.f32.mrb[0].mxu0
        %v406 = vadd.f32 %v258, %v405
        %407 = vmatprep.mubr.bf16.mxu0 0
        %408 = vmatmul.mubr.bf16.gmra.mrb[0].mxu0 %v278
        %v409 = vpop.f32.mrb[0].mxu0
        %v410 = vadd.f32 %v254, %v409
        %v411 = vpop.f32.mrb[0].mxu0
        %v412 = vadd.f32 %v258, %v411
        %v413 = vpop.f32.mrb[0].mxu0
        %v414 = vadd.f32 %v254, %v413
        %v415 = vpop.f32.mrb[0].mxu0
        %v416 = vadd.f32 %v258, %v415
        %417 = vmatprep.mubr.bf16.mxu0 0
        %418 = vmatmul.mubr.bf16.gmra.mrb[0].mxu0 %v279
        %v419 = vpop.f32.mrb[0].mxu0
        %v420 = vadd.f32 %v254, %v419
        %v421 = vpop.f32.mrb[0].mxu0
        %v422 = vadd.f32 %v258, %v421
        %v423 = vpop.f32.mrb[0].mxu0
        %v424 = vadd.f32 %v254, %v423
        %v425 = vpop.f32.mrb[0].mxu0
        %v426 = vadd.f32 %v258, %v425
        %427 = vmatprep.mubr.bf16.mxu0 0
        %428 = vmatmul.mubr.bf16.gmra.mrb[0].mxu0 %v280
        %v429 = vpop.f32.mrb[0].mxu0
        %v430 = vadd.f32 %v254, %v429
        %v431 = vpop.f32.mrb[0].mxu0
        %v432 = vadd.f32 %v258, %v431
        %v433 = vpop.f32.mrb[0].mxu0
        %v434 = vadd.f32 %v254, %v433
        %v435 = vpop.f32.mrb[0].mxu0
        %v436 = vadd.f32 %v258, %v435
        %437 = vdwg.mxu0
        %v438 = vpack.c.bf16 %v404, %v400
        %v439 = vpack.c.bf16 %v406, %v402
        %v440 = vpack.c.bf16 %v414, %v410
        %v441 = vpack.c.bf16 %v416, %v412
        %v442 = vpack.c.bf16 %v424, %v420
        %v443 = vpack.c.bf16 %v426, %v422
        %v444 = vpack.c.bf16 %v434, %v430
        %v445 = vpack.c.bf16 %v436, %v432
        %v454 = vunpack.c.l.b16 %v438
        %v455 = vunpack.c.l.b16 %v439
        %v456 = vunpack.c.h.b16 %v438
        %v457 = vunpack.c.h.b16 %v439
        %v458 = vunpack.c.l.b16 %v440
        %v459 = vunpack.c.l.b16 %v441
        %v460 = vunpack.c.h.b16 %v440
        %v461 = vunpack.c.h.b16 %v441
        %v462 = vunpack.c.l.b16 %v442
        %v463 = vunpack.c.l.b16 %v443
        %v464 = vunpack.c.h.b16 %v442
        %v465 = vunpack.c.h.b16 %v443
        %v466 = vunpack.c.l.b16 %v444
        %v467 = vunpack.c.l.b16 %v445
        %v468 = vunpack.c.h.b16 %v444
        %v469 = vunpack.c.h.b16 %v445
        %v470 = vpack.c.b16 %v455, %v454
        %v471 = vpack.c.b16 %v457, %v456
        %v472 = vpack.c.b16 %v459, %v458
        %v473 = vpack.c.b16 %v461, %v460
        %v474 = vpack.c.b16 %v463, %v462
        %v475 = vpack.c.b16 %v465, %v464
        %v476 = vpack.c.b16 %v467, %v466
        %v477 = vpack.c.b16 %v469, %v468
        %486 = vst [vmem:[%s221] sm:$0xff] %v470
        %487 = vst [vmem:[%s221 + $0x8] sm:$0xff] %v470
        %488 = vst [vmem:[%s221 + $0x10] sm:$0xff] %v471
        %489 = vst [vmem:[%s221 + $0x18] sm:$0xff] %v471
        %490 = vst [vmem:[%s221 + $0x20] sm:$0xff] %v472
        %491 = vst [vmem:[%s221 + $0x28] sm:$0xff] %v472
        %492 = vst [vmem:[%s221 + $0x30] sm:$0xff] %v473
        %493 = vst [vmem:[%s221 + $0x38] sm:$0xff] %v473
        %494 = vst [vmem:[%s221 + $0x40] sm:$0xff] %v474
        %495 = vst [vmem:[%s221 + $0x48] sm:$0xff] %v474
        %496 = vst [vmem:[%s221 + $0x50] sm:$0xff] %v475
        %497 = vst [vmem:[%s221 + $0x58] sm:$0xff] %v475
        %498 = vst [vmem:[%s221 + $0x60] sm:$0xff] %v476
        %499 = vst [vmem:[%s221 + $0x68] sm:$0xff] %v476
        %500 = vst [vmem:[%s221 + $0x70] sm:$0xff] %v477
        %501 = vst [vmem:[%s221 + $0x78] sm:$0xff] %v477
        %s502 = sand.u32 %s113, 1
        %s503 = scalar_lea.sflag [#allocation4], %s502
        %s504 = sand.u32 %s113, 1
        %s505 = smul.addr %s504, 128
        %s506 = scalar_lea.vmem [#allocation7], %s505
        // Predicated region
        $region41: #{tpu_custom_call.1} parent=31 // pred_check
          %p507 = pneg %p123
        $region42: #{tpu_custom_call.1} parent=31 // pred_check_branch
          %509 = sbr.rel (%p507) target = $region44
        $region43: #{tpu_custom_call.1} parent=31 // pred_region
          %s510 = smul.u32 16, %s26
          %s512 = ssub.s32 2048, 2048
          %513 = vsyncadd %s503, %s512
          %s514 = smul.addr %s510, 2
          %s515 = smul.addr %s25, 32
          %s516 = sadd.s32 %s514, %s515
          %s517 = smul.addr %s516, 64
          %s518 = scalar_lea.hbm %s3, %s517
          %s519 = sshll.u32 %s506, 4
          %s520 = int_to_ptr.vmem [resolvable:$true] %s519
          %525 = dma.vmem_to_hbm [thread:$0]  %s520, 2048, %s518, %s503, 128, 128, 8
        $region44: #{tpu_custom_call.1} parent=31 // pred_fallthru
          _
      $region32: #{tpu_custom_call.1} parent=5 // pred_fallthru
        _
      %p526 = scmp.le.s32.totalorder 2, %s16
      // Predicated region
      $region45: #{tpu_custom_call.1} parent=5 // pred_check
        %p527 = pneg %p526
      $region46: #{tpu_custom_call.1} parent=5 // pred_check_branch
        %529 = sbr.rel (%p527) target = $region48
      $region47: #{tpu_custom_call.1} parent=5 // pred_region
        %s530 = ssub.s32 %s16, 2
        // Predicated region
        $region49: #{tpu_custom_call.1} parent=47 // pred_check
          %p531 = pneg %p129
        $region50: #{tpu_custom_call.1} parent=47 // pred_check_branch
          %533 = sbr.rel (%p531) target = $region52
        $region51: #{tpu_custom_call.1} parent=47 // pred_region
          %s534 = sand.u32 %s114, 1
          %s535 = scalar_lea.sflag [#allocation4], %s534
          %s536 = sand.u32 %s114, 1
          %s537 = smul.addr %s536, 128
          %s538 = scalar_lea.vmem [#allocation7], %s537
          %539 = dma.done %s535, 2048
        $region52: #{tpu_custom_call.1} parent=47 // pred_fallthru
          _
      $region48: #{tpu_custom_call.1} parent=5 // pred_fallthru
        _
    $region6: #{tpu_custom_call.1} parent=1 // loop_footer
      %s20 = sadd.s32 1, %s16
    $region7: #{tpu_custom_call.1} parent=1 // loop_footer_branch
      %15 = sbr.rel target = $region3
    $region8: #{tpu_custom_call.1} parent=1 // loop_exit
      _
    %540 = vsyncpa [#allocation3], 1
    %s541 = scalar_lea.sflag [#allocation3], 1
    %542 = vsyncpa %s541, 1
    %543 = vsyncpa [#allocation6], 1
    %544 = vsyncpa [#allocation4], 1
    %s545 = scalar_lea.sflag [#allocation4], 1
    %546 = vsyncpa %s545, 1

</llo_original>
